<compile_context>
chip_gen: v6e
topology: v6e:2x2x1
jax: 0.10.0
libtpu: 0.0.40
codegen_flags: <defaults>
</compile_context>

<pallas_src>
import functools

import jax
import jax.numpy as jnp
from jax import lax
from jax.experimental import pallas as pl
from jax.experimental.pallas import tpu as pltpu


_LANES = 128


# ---------------------------------------------------------------------------
# VMEM budgeting (generation-aware)
# ---------------------------------------------------------------------------

def _vmem_capacity_bytes():
    """Physical VMEM of the current TPU generation (conservative fallback)."""
    try:
        return int(pltpu.get_tpu_info().vmem_capacity_bytes)
    except Exception:
        return 64 * 1024 * 1024        # v7x physical VMEM (smallest generation)


def _vmem_plan():
    cap = _vmem_capacity_bytes()
    data_budget = int(cap * 0.60)      # pipelined data blocks (in+out, 2-buffered)
    vmem_limit = (cap * 7) // 8        # scoped limit handed to Mosaic
    return data_budget, vmem_limit


# ---------------------------------------------------------------------------
# In-kernel helpers
# ---------------------------------------------------------------------------

def _sigmoid(s):
    # exp -> EUP.  Reciprocal kept exact: operand is only (Bt, C), invisible
    # under the HBM stream, and exactness keeps parity with jax.nn.sigmoid.
    return pl.reciprocal(1.0 + jnp.exp(-s), approx=False)


def _excite(pooled, w1, w2):
    """pooled: (n, C) f32 -> per-channel gate (n, C) f32."""
    h = jnp.maximum(jnp.dot(pooled, w1, preferred_element_type=jnp.float32), 0.0)
    s = jnp.dot(h, w2, preferred_element_type=jnp.float32)
    return _sigmoid(s)


def _chunked_lsum_f32(x_ref, lanes_span, base=None, true_l=None):
    """Sum x_ref[:, :, :lanes_span] over the last axis in f32.

    lanes_span must be a multiple of 128.  128-lane slices are cast and
    accumulated with VPU adds into an (n, c, 128) f32 accumulator (no full
    f32 copy of the block); the cross-lane reduce runs once at the end.
    If base/true_l are given, lanes whose global index >= true_l are masked
    to zero (ragged last tile), keeping the mean unbiased.
    """
    n, c = x_ref.shape[0], x_ref.shape[1]
    nchunks = lanes_span // _LANES
    masked = base is not None
    lane_iota = (lax.broadcasted_iota(jnp.int32, (n, c, _LANES), 2)
                 if masked else None)
    zero = jnp.zeros((n, c, _LANES), jnp.float32)

    def add_chunk(j, acc, aligned_hint):
        start = j * _LANES
        if aligned_hint:
            start = pl.multiple_of(start, _LANES)
        sl = x_ref[:, :, pl.ds(start, _LANES)].astype(jnp.float32)
        if masked:
            sl = jnp.where(base + j * _LANES + lane_iota < true_l, sl, 0.0)
        return acc + sl

    if nchunks <= 8:
        acc = zero
        for j in range(nchunks):                       # short, static: unrolled
            acc = add_chunk(j, acc, aligned_hint=False)
    else:
        acc = lax.fori_loop(0, nchunks,
                            lambda j, a: add_chunk(j, a, aligned_hint=True),
                            zero)
    return jnp.sum(acc, axis=-1)                       # (n, c): one XLU reduce


# ---------------------------------------------------------------------------
# Kernels
# ---------------------------------------------------------------------------

def _se_fused_kernel(x_ref, w1_ref, w2_ref, o_ref, *, inv_l):
    """Fused path: (Bt, C, L) block per program; squeeze+excite+scale."""
    n, c, l = x_ref.shape
    lm = (l // _LANES) * _LANES

    pooled = jnp.zeros((n, c), jnp.float32)
    if lm > 0:
        pooled = _chunked_lsum_f32(x_ref, lm)
    if l > lm:                                          # static sub-128 tail
        pooled = pooled + jnp.sum(x_ref[:, :, lm:].astype(jnp.float32), axis=-1)

    y = _excite(pooled * inv_l, w1_ref[...], w2_ref[...])      # (n, C) f32
    # Scale in x's native dtype (cast the tiny gate down, not x up).
    o_ref[...] = x_ref[...] * y.astype(o_ref.dtype)[:, :, None]


def _se_pool_excite_kernel(x_ref, w1_ref, w2_ref, y_ref, *, inv_l, true_l, ragged):
    """Two-pass path, pass 1: reduce L-tiles into y_ref, then excite."""
    lt = pl.program_id(1)

    @pl.when(lt == 0)
    def _():
        y_ref[...] = jnp.zeros_like(y_ref)

    l_tile = x_ref.shape[2]
    if ragged:
        y_ref[...] += _chunked_lsum_f32(x_ref, l_tile,
                                        base=lt * l_tile, true_l=true_l)
    else:
        y_ref[...] += _chunked_lsum_f32(x_ref, l_tile)

    @pl.when(lt == pl.num_programs(1) - 1)
    def _():
        y_ref[...] = _excite(y_ref[...] * inv_l, w1_ref[...], w2_ref[...])


def _se_scale_kernel(x_ref, y_ref, o_ref):
    """Two-pass path, pass 2: o = x * y (broadcast over L), in x's dtype."""
    o_ref[...] = x_ref[...] * y_ref[...].astype(o_ref.dtype)[:, :, None]


# ---------------------------------------------------------------------------
# Wrapper
# ---------------------------------------------------------------------------

def se_layer(x, w1_t, w2_t, *, l_tile=None, donate_x=False):
    """Squeeze-and-Excitation forward.

    x:      (B, C, L), float dtype.
    w1_t:   (C, C//r) = W1.T of the first bias-free Linear.
    w2_t:   (C//r, C) = W2.T of the second bias-free Linear.
    l_tile: optional L-tile size (multiple of 128); forces the two-pass path.
    donate_x: alias x's HBM buffer to the output.  Safe in the two-pass path
            because pass 2 depends on y produced by pass 1, which sequences
            the in-place overwrite of x after pass 1's read.
    """
    B, C, L = x.shape
    H = w1_t.shape[1]
    assert w1_t.shape == (C, H) and w2_t.shape == (H, C), (w1_t.shape, w2_t.shape)

    itemsize = jnp.dtype(x.dtype).itemsize
    inv_l = 1.0 / float(L)
    io_aliases = {0: 0} if donate_x else {}

    data_budget, vmem_limit = _vmem_plan()
    # Resident weights (count double-buffered, they are tiny anyway).
    w_bytes = 2 * 2 * (C * H + H * C) * jnp.dtype(w1_t.dtype).itemsize
    # Per-batch-row cost of a fused block: in + out blocks (double-buffered
    # each) plus the f32 chunked-reduce accumulator.
    per_b_bytes = 4 * C * L * itemsize + C * _LANES * 4

    if l_tile is None and per_b_bytes + w_bytes <= data_budget:
        # -------- fused path: 2x HBM traffic, grid over batch ----------------
        bt = max(1, min(B, (data_budget - w_bytes) // per_b_bytes))
        if B >= 2:
            bt = min(bt, (B + 1) // 2)      # >= 2 grid steps -> v7x can shard TCs
        nb = (B + bt - 1) // bt
        return pl.pallas_call(
            functools.partial(_se_fused_kernel, inv_l=inv_l),
            out_shape=jax.ShapeDtypeStruct((B, C, L), x.dtype),
            grid=(nb,),
            in_specs=[
                pl.BlockSpec((bt, C, L), lambda b: (b, 0, 0)),
                pl.BlockSpec((C, H), lambda b: (0, 0)),
                pl.BlockSpec((H, C), lambda b: (0, 0)),
            ],
            out_specs=pl.BlockSpec((bt, C, L), lambda b: (b, 0, 0)),
            input_output_aliases=io_aliases,
            compiler_params=pltpu.CompilerParams(
                dimension_semantics=("parallel",),
                vmem_limit_bytes=vmem_limit),
        )(x, w1_t, w2_t)

    # -------- two-pass path: 3x HBM traffic, L is tiled ----------------------
    if l_tile is None:
        l128 = ((L + _LANES - 1) // _LANES) * _LANES
        acc_bytes = C * _LANES * 4
        l_tile = next(
            (t for t in (8192, 4096, 2048, 1024, 512, 256, 128)
             if t <= l128 and 4 * C * t * itemsize + acc_bytes + w_bytes <= data_budget),
            128)
    assert l_tile % _LANES == 0, "l_tile must be a multiple of 128"
    n_lt = (L + l_tile - 1) // l_tile
    ragged = (L % l_tile) != 0

    # Pass 1: squeeze (masked mean over L-tiles) + excitation -> (B, C) gate.
    y = pl.pallas_call(
        functools.partial(_se_pool_excite_kernel,
                          inv_l=inv_l, true_l=L, ragged=ragged),
        out_shape=jax.ShapeDtypeStruct((B, C), jnp.float32),
        grid=(B, n_lt),
        in_specs=[
            pl.BlockSpec((1, C, l_tile), lambda b, l: (b, 0, l)),
            pl.BlockSpec((C, H), lambda b, l: (0, 0)),
            pl.BlockSpec((H, C), lambda b, l: (0, 0)),
        ],
        out_specs=pl.BlockSpec((1, C), lambda b, l: (b, 0)),
        compiler_params=pltpu.CompilerParams(
            dimension_semantics=("parallel", "arbitrary"),
            vmem_limit_bytes=vmem_limit),
    )(x, w1_t, w2_t)

    # Pass 2: stream x again (lane-dense L-tiles) and apply the gate.
    return pl.pallas_call(
        _se_scale_kernel,
        out_shape=jax.ShapeDtypeStruct((B, C, L), x.dtype),
        grid=(B, n_lt),
        in_specs=[
            pl.BlockSpec((1, C, l_tile), lambda b, l: (b, 0, l)),
            pl.BlockSpec((1, C), lambda b, l: (b, 0)),
        ],
        out_specs=pl.BlockSpec((1, C, l_tile), lambda b, l: (b, 0, l)),
        input_output_aliases=io_aliases,
        compiler_params=pltpu.CompilerParams(
            dimension_semantics=("parallel", "parallel"),
            vmem_limit_bytes=vmem_limit),
    )(x, y)


def se_layer_ref(x, w1_t, w2_t):
    """Pure-JAX reference (mirrors the PyTorch forward)."""
    pooled = jnp.mean(x.astype(jnp.float32), axis=-1)
    h = jnp.maximum(pooled @ w1_t, 0.0)
    y = jax.nn.sigmoid(h @ w2_t)
    return (x * y[:, :, None].astype(x.dtype)).astype(x.dtype)


if __name__ == "__main__":
    key = jax.random.PRNGKey(0)
    kx, k1, k2, kx2, kx3 = jax.random.split(key, 5)

    # Module config: channel=64, reduction=16 (the nn.Module default).
    B, C, reduction = 2, 64, 16
    H = C // reduction  # 4
    # PyTorch Linear weights: W1 (H, C), W2 (C, H).  Pass transposed.
    W1 = jax.random.normal(k1, (H, C), dtype=jnp.float32) * 0.1
    W2 = jax.random.normal(k2, (C, H), dtype=jnp.float32) * 0.1
    w1_t, w2_t = W1.T, W2.T           # (C, H), (H, C)

    # Case 1: small spatial length -> fused path (Bt batch rows per block).
    L = 16
    x = jax.random.normal(kx, (B, C, L), dtype=jnp.float32)
    out = jax.block_until_ready(se_layer(x, w1_t, w2_t))
    ref = se_layer_ref(x, w1_t, w2_t)
    assert out.shape == (B, C, L)
    assert jnp.allclose(out, ref, atol=1e-5, rtol=1e-5), "fused path mismatch"

    # Case 2: larger L, force the two-pass path with 128-wide lane-dense tiles.
    L2 = 512
    x2 = jax.random.normal(kx2, (B, C, L2), dtype=jnp.float32)
    out2 = jax.block_until_ready(se_layer(x2, w1_t, w2_t, l_tile=128))
    ref2 = se_layer_ref(x2, w1_t, w2_t)
    assert out2.shape == (B, C, L2)
    assert jnp.allclose(out2, ref2, atol=1e-5, rtol=1e-5), "two-pass mismatch"

    # Case 3: ragged L (not a multiple of the tile) -> masked tail tile.
    L3 = 320
    x3 = jax.random.normal(kx3, (B, C, L3), dtype=jnp.float32)
    out3 = jax.block_until_ready(se_layer(x3, w1_t, w2_t, l_tile=128))
    ref3 = se_layer_ref(x3, w1_t, w2_t)
    assert out3.shape == (B, C, L3)
    assert jnp.allclose(out3, ref3, atol=1e-5, rtol=1e-5), "ragged-tail mismatch"

    print("KERNEL_OK")
</pallas_src>

<mosaic_0001>
module attributes {stable_mosaic.version = 11 : i64} {
  func.func @_se_fused_kernel(%arg0: i32, %arg1: memref<1x64x16xf32, #tpu.memory_space<vmem>>, %arg2: memref<64x4xf32, #tpu.memory_space<vmem>>, %arg3: memref<4x64xf32, #tpu.memory_space<vmem>>, %arg4: memref<1x64x16xf32, #tpu.memory_space<vmem>>) attributes {dimension_semantics = [#tpu.dimension_semantics<parallel>], iteration_bounds = array<i64: 2>, scalar_prefetch = 0 : i64, scratch_operands = 0 : i64, tpu.core_type = #tpu.core_type<tc>, window_params = [{transform_indices = @transform_0, window_bounds = array<i64: 1, 64, 16>}, {pipeline_mode = #tpu.pipeline_mode<synchronous>, transform_indices = @transform_1, window_bounds = array<i64: 64, 4>}, {pipeline_mode = #tpu.pipeline_mode<synchronous>, transform_indices = @transform_2, window_bounds = array<i64: 4, 64>}, {transform_indices = @transform_3, window_bounds = array<i64: 1, 64, 16>}]} {
    %cst = arith.constant 0.000000e+00 : f32
    %0 = vector.broadcast %cst : f32 to vector<1x64xf32>
    %c0 = arith.constant 0 : index
    %c0_0 = arith.constant 0 : index
    %c0_1 = arith.constant 0 : index
    %1 = vector.load %arg1[%c0, %c0_0, %c0_1] : memref<1x64x16xf32, #tpu.memory_space<vmem>>, vector<1x64x16xf32>
    %cst_2 = arith.constant dense<0.000000e+00> : vector<1x64xf32>
    %2 = vector.multi_reduction <add>, %1, %cst_2 [2] : vector<1x64x16xf32> to vector<1x64xf32>
    %3 = arith.addf %0, %2 : vector<1x64xf32>
    %cst_3 = arith.constant 6.250000e-02 : f32
    %4 = vector.broadcast %cst_3 : f32 to vector<1x64xf32>
    %5 = arith.mulf %3, %4 : vector<1x64xf32>
    %c0_4 = arith.constant 0 : index
    %c0_5 = arith.constant 0 : index
    %6 = vector.load %arg2[%c0_4, %c0_5] : memref<64x4xf32, #tpu.memory_space<vmem>>, vector<64x4xf32>
    %c0_6 = arith.constant 0 : index
    %c0_7 = arith.constant 0 : index
    %7 = vector.load %arg3[%c0_6, %c0_7] : memref<4x64xf32, #tpu.memory_space<vmem>>, vector<4x64xf32>
    %cst_8 = arith.constant dense<0.000000e+00> : vector<1x4xf32>
    %8 = tpu.matmul %5, %6, %cst_8 {dimension_numbers = #tpu.dot_dimension_numbers<[1], [0], [0], [1], [0, 0, 1, 1], [], []>} : vector<1x64xf32>, vector<64x4xf32>, vector<1x4xf32> -> vector<1x4xf32>
    %cst_9 = arith.constant 0.000000e+00 : f32
    %9 = vector.broadcast %cst_9 : f32 to vector<1x4xf32>
    %10 = arith.maximumf %8, %9 : vector<1x4xf32>
    %cst_10 = arith.constant dense<0.000000e+00> : vector<1x64xf32>
    %11 = tpu.matmul %10, %7, %cst_10 {dimension_numbers = #tpu.dot_dimension_numbers<[1], [0], [0], [1], [0, 0, 1, 1], [], []>} : vector<1x4xf32>, vector<4x64xf32>, vector<1x64xf32> -> vector<1x64xf32>
    %cst_11 = arith.constant 0.000000e+00 : f32
    %12 = vector.broadcast %cst_11 : f32 to vector<1x64xf32>
    %13 = arith.subf %12, %11 : vector<1x64xf32>
    %14 = math.exp %13 : vector<1x64xf32>
    %cst_12 = arith.constant 1.000000e+00 : f32
    %15 = vector.broadcast %cst_12 : f32 to vector<1x64xf32>
    %16 = arith.addf %15, %14 : vector<1x64xf32>
    %17 = tpu.reciprocal %16 : vector<1x64xf32> -> vector<1x64xf32>
    %c0_13 = arith.constant 0 : index
    %c0_14 = arith.constant 0 : index
    %c0_15 = arith.constant 0 : index
    %18 = vector.load %arg1[%c0_13, %c0_14, %c0_15] : memref<1x64x16xf32, #tpu.memory_space<vmem>>, vector<1x64x16xf32>
    %19 = vector.shape_cast %17 : vector<1x64xf32> to vector<1x64x1xf32>
    %20 = vector.broadcast %19 : vector<1x64x1xf32> to vector<1x64x16xf32>
    %21 = arith.mulf %18, %20 : vector<1x64x16xf32>
    %c0_16 = arith.constant 0 : index
    %c0_17 = arith.constant 0 : index
    %c0_18 = arith.constant 0 : index
    %22 = vector.load %arg4[%c0_16, %c0_17, %c0_18] : memref<1x64x16xf32, #tpu.memory_space<vmem>>, vector<1x64x16xf32>
    tpu.vector_store %arg4[%c0_16, %c0_17, %c0_18], %21 {strides = array<i32>} : memref<1x64x16xf32, #tpu.memory_space<vmem>>, vector<1x64x16xf32>,
    return
  }
  func.func @transform_0(%arg0: i32) -> (i32, i32, i32) {
    %c0_i32 = arith.constant 0 : i32
    %c0_i32_0 = arith.constant 0 : i32
    %c0_i32_1 = arith.constant 0 : i32
    return %arg0, %c0_i32, %c0_i32_0 : i32, i32, i32
  }
  func.func @transform_1(%arg0: i32) -> (i32, i32) {
    %c0_i32 = arith.constant 0 : i32
    %c0_i32_0 = arith.constant 0 : i32
    %c0_i32_1 = arith.constant 0 : i32
    return %c0_i32, %c0_i32_0 : i32, i32
  }
  func.func @transform_2(%arg0: i32) -> (i32, i32) {
    %c0_i32 = arith.constant 0 : i32
    %c0_i32_0 = arith.constant 0 : i32
    %c0_i32_1 = arith.constant 0 : i32
    return %c0_i32, %c0_i32_0 : i32, i32
  }
  func.func @transform_3(%arg0: i32) -> (i32, i32, i32) {
    %c0_i32 = arith.constant 0 : i32
    %c0_i32_0 = arith.constant 0 : i32
    %c0_i32_1 = arith.constant 0 : i32
    return %arg0, %c0_i32, %c0_i32_0 : i32, i32, i32
  }
}

</mosaic_0001>

<llo_original>
// kernel: tpu_custom_call.1
$region0: #{tpu_custom_call.1}
  #allocation0 [shape = 'u32[]', space=smem, size = 0x4, offset = 0x4, fixed_abs, tag = 'smem constant byte address 0x4 - core index']
  #allocation1 [shape = 'u32[144,128]{1,0:T(1,128)}', space=vmem, size = 0x12000, scoped, tag = 'internal scratch']
  %s0 = inlined_call_operand.vmem [shape: f32[2,64,16], index: 0, kind: input, shape index: {}]
  %s1 = inlined_call_operand.vmem [shape: f32[64,4], index: 1, kind: input, shape index: {}]
  %s2 = inlined_call_operand.vmem [shape: f32[4,64], index: 2, kind: input, shape index: {}]
  %s3 = inlined_call_operand.vmem [shape: f32[2,64,16], index: 3, kind: output, shape index: {}]
  %s4 = sld [smem:[#allocation0]]
  $region45: #{tpu_custom_call.1} parent=0
    _
  %s6 = ssub.s32 1, %s4
  %s7 = scalar_select 0, %s6, %s4
  loop: start=0, step=1, limit=4
  $region2: #{tpu_custom_call.1} parent=0 // loop_pre_header
    _
  $region3: #{tpu_custom_call.1} parent=0 // loop_header
    %s9 = sphi 0, %s13
    %p10 = scmp.ge.s32.totalorder %s9, 4
    %s19 = sphi 0, %s21
    %s22 = sphi 0, %s19
    %s23 = sphi 0, %s22
    %s39 = sphi 0, %s23
    %s43 = sphi 0, %s43
    %s45 = sphi 0, %s43
    %s46 = sphi 0, %s45
    %s60 = sphi 0, %s46
    %s64 = sphi 0, %s64
    %s66 = sphi 0, %s64
    %s67 = sphi 0, %s66
    %s81 = sphi 0, %s67
    %s87 = sphi 0, %s89
    %s90 = sphi 0, %s87
    %s91 = sphi 0, %s90
    %s107 = sphi 0, %s91
  $region4: #{tpu_custom_call.1} parent=0 // loop_header_branch
    %12 = sbr.rel (%p10) target = $region8
  $region5: #{tpu_custom_call.1} parent=0 // loop_body
    %s14 = ssub.s32 %s9, 1
    %s15 = ssub.s32 %s9, 2
    %s16 = sadd.s32 %s9, 1
    %s17 = ssub.s32 %s9, %s16
    %p18 = scmp.eq.s32.totalorder %s17, 0
    %s20 = sadd.s32 %s19, 1
    %s21 = scalar_select %p18, %s19, %s20
    %p24 = pneg %p18
    %p25 = scmp.eq.s32.totalorder %s9, 1
    %p26 = por %p24, %p25
    %p27 = scmp.ne.s32.totalorder %s19, %s22
    %p28 = scmp.eq.s32.totalorder %s9, 0
    %p29 = por %p27, %p28
    %p30 = scmp.ne.s32.totalorder %s19, %s22
    %p31 = scmp.eq.s32.totalorder %s14, 1
    %p32 = por %p30, %p31
    %p33 = scmp.ne.s32.totalorder %s22, %s23
    %p34 = scmp.eq.s32.totalorder %s14, 0
    %p35 = por %p33, %p34
    %p36 = scmp.ne.s32.totalorder %s22, %s23
    %p37 = scmp.eq.s32.totalorder %s15, 1
    %p38 = por %p36, %p37
    %p40 = scmp.ne.s32.totalorder %s23, %s39
    %p41 = scmp.eq.s32.totalorder %s15, 0
    %p42 = por %p40, %p41
    %s44 = sadd.s32 %s43, 1
    %p47 = scmp.eq.s32.totalorder %s9, 1
    %p48 = scmp.ne.s32.totalorder %s43, %s45
    %p49 = scmp.eq.s32.totalorder %s9, 0
    %p50 = por %p48, %p49
    %p51 = scmp.ne.s32.totalorder %s43, %s45
    %p52 = scmp.eq.s32.totalorder %s14, 1
    %p53 = por %p51, %p52
    %p54 = scmp.ne.s32.totalorder %s45, %s46
    %p55 = scmp.eq.s32.totalorder %s14, 0
    %p56 = por %p54, %p55
    %p57 = scmp.ne.s32.totalorder %s45, %s46
    %p58 = scmp.eq.s32.totalorder %s15, 1
    %p59 = por %p57, %p58
    %p61 = scmp.ne.s32.totalorder %s46, %s60
    %p62 = scmp.eq.s32.totalorder %s15, 0
    %p63 = por %p61, %p62
    %s65 = sadd.s32 %s64, 1
    %p68 = scmp.eq.s32.totalorder %s9, 1
    %p69 = scmp.ne.s32.totalorder %s64, %s66
    %p70 = scmp.eq.s32.totalorder %s9, 0
    %p71 = por %p69, %p70
    %p72 = scmp.ne.s32.totalorder %s64, %s66
    %p73 = scmp.eq.s32.totalorder %s14, 1
    %p74 = por %p72, %p73
    %p75 = scmp.ne.s32.totalorder %s66, %s67
    %p76 = scmp.eq.s32.totalorder %s14, 0
    %p77 = por %p75, %p76
    %p78 = scmp.ne.s32.totalorder %s66, %s67
    %p79 = scmp.eq.s32.totalorder %s15, 1
    %p80 = por %p78, %p79
    %p82 = scmp.ne.s32.totalorder %s67, %s81
    %p83 = scmp.eq.s32.totalorder %s15, 0
    %p84 = por %p82, %p83
    %s85 = ssub.s32 %s9, %s16
    %p86 = scmp.eq.s32.totalorder %s85, 0
    %s88 = sadd.s32 %s87, 1
    %s89 = scalar_select %p86, %s87, %s88
    %p92 = pneg %p86
    %p93 = scmp.eq.s32.totalorder %s9, 1
    %p94 = por %p92, %p93
    %p95 = scmp.ne.s32.totalorder %s87, %s90
    %p96 = scmp.eq.s32.totalorder %s9, 0
    %p97 = por %p95, %p96
    %p98 = scmp.ne.s32.totalorder %s87, %s90
    %p99 = scmp.eq.s32.totalorder %s14, 1
    %p100 = por %p98, %p99
    %p101 = scmp.ne.s32.totalorder %s90, %s91
    %p102 = scmp.eq.s32.totalorder %s14, 0
    %p103 = por %p101, %p102
    %p104 = scmp.ne.s32.totalorder %s90, %s91
    %p105 = scmp.eq.s32.totalorder %s15, 1
    %p106 = por %p104, %p105
    %p108 = scmp.ne.s32.totalorder %s91, %s107
    %p109 = scmp.eq.s32.totalorder %s15, 0
    %p110 = por %p108, %p109
    %p111 = scmp.le.s32.totalorder 1, %s9
    %p112 = scmp.lt.s32.totalorder %s9, 3
    %p113 = pnand %p111, %p112
    %p114 = pneg %p113
    // Predicated region
    $region9: #{tpu_custom_call.1} parent=5 // pred_check
      _
    $region10: #{tpu_custom_call.1} parent=5 // pred_check_branch
      %116 = sbr.rel (%p113) target = $region12
    $region11: #{tpu_custom_call.1} parent=5 // pred_region
      %s117 = ssub.s32 %s9, 1
      // Predicated region
      $region13: #{tpu_custom_call.1} parent=11 // pred_check
        %p118 = pneg %p56
      $region14: #{tpu_custom_call.1} parent=11 // pred_check_branch
        %120 = sbr.rel (%p118) target = $region16
      $region15: #{tpu_custom_call.1} parent=11 // pred_region
        _
      $region16: #{tpu_custom_call.1} parent=11 // pred_fallthru
        _
      // Predicated region
      $region17: #{tpu_custom_call.1} parent=11 // pred_check
        %p121 = pneg %p77
      $region18: #{tpu_custom_call.1} parent=11 // pred_check_branch
        %123 = sbr.rel (%p121) target = $region20
      $region19: #{tpu_custom_call.1} parent=11 // pred_region
        _
      $region20: #{tpu_custom_call.1} parent=11 // pred_fallthru
        _
    $region12: #{tpu_custom_call.1} parent=5 // pred_fallthru
      _
    %p124 = scmp.lt.s32.totalorder %s9, 2
    // Predicated region
    $region21: #{tpu_custom_call.1} parent=5 // pred_check
      %p125 = pneg %p124
    $region22: #{tpu_custom_call.1} parent=5 // pred_check_branch
      %127 = sbr.rel (%p125) target = $region24
    $region23: #{tpu_custom_call.1} parent=5 // pred_region
      // Predicated region
      $region25: #{tpu_custom_call.1} parent=23 // pred_check
        %p128 = pneg %p29
      $region26: #{tpu_custom_call.1} parent=23 // pred_check_branch
        %130 = sbr.rel (%p128) target = $region28
      $region27: #{tpu_custom_call.1} parent=23 // pred_region
        %p131 = scmp.lt.s32.totalorder %s9, 1
        %s132 = scalar_select %p131, %s9, 1
        %s133 = smul.addr %s132, 8
        %s134 = smul.addr %s133, 8
        %s135 = scalar_lea.vmem %s0, %s134
      $region28: #{tpu_custom_call.1} parent=23 // pred_fallthru
        _
    $region24: #{tpu_custom_call.1} parent=5 // pred_fallthru
      _
    %p136 = scmp.le.s32.totalorder 1, %s9
    %p137 = scmp.lt.s32.totalorder %s9, 3
    %p138 = pnand %p136, %p137
    %p139 = pneg %p138
    // Predicated region
    $region29: #{tpu_custom_call.1} parent=5 // pred_check
      _
    $region30: #{tpu_custom_call.1} parent=5 // pred_check_branch
      %141 = sbr.rel (%p138) target = $region32
    $region31: #{tpu_custom_call.1} parent=5 // pred_region
      %s142 = ssub.s32 %s9, 1
      %p143 = scmp.lt.s32.totalorder %s14, 1
      %s144 = scalar_select %p143, %s14, 1
      %s145 = smul.addr %s144, 8
      %s146 = smul.addr %s145, 8
      %s147 = scalar_lea.vmem %s0, %s146
      %p148 = pneg %p35
      %p149 = pneg %p32
      %p150 = pneg %p56
      %p151 = pneg %p53
      %p152 = pneg %p77
      %p153 = pneg %p74
      %p154 = pneg %p103
      %p155 = pneg %p100
      %p156 = scmp.lt.s32.totalorder %s14, 1
      %s157 = scalar_select %p156, %s14, 1
      %s158 = smul.addr %s157, 8
      %s159 = smul.addr %s158, 8
      %s160 = scalar_lea.vmem %s3, %s159
      %p161 = scmp.lt.s32.totalorder %s14, 1
      %s162 = scalar_select %p161, %s14, 1
      %s163 = smul.addr %s162, 8
      %s164 = smul.addr %s163, 8
      %s165 = scalar_lea.vmem %s0, %s164
      %p166 = scmp.lt.s32.totalorder %s14, 1
      %s167 = scalar_select %p166, %s14, 1
      %s168 = smul.addr %s167, 8
      %s169 = smul.addr %s168, 8
      %s170 = scalar_lea.vmem %s3, %s169
      %v171 = vld [vmem:[%s165] sm:$0xff]
      %v172 = vld [vmem:[%s165 + $0x8] sm:$0xff]
      %v173 = vld [vmem:[%s165 + $0x10] sm:$0xff]
      %v174 = vld [vmem:[%s165 + $0x18] sm:$0xff]
      %v175 = vld [vmem:[%s165 + $0x20] sm:$0xff]
      %v176 = vld [vmem:[%s165 + $0x28] sm:$0xff]
      %v177 = vld [vmem:[%s165 + $0x30] sm:$0xff]
      %v178 = vld [vmem:[%s165 + $0x38] sm:$0xff]
      %vm179 = vcmask 130048
      %v180 = vsel %vm179, %v171, 0.0
      %181 = vadd.xlane.f32.xlu0 %v180
      %v182 = vpop.xlane.xlu0 %181
      %v183 = vsel %vm179, %v172, 0.0
      %184 = vadd.xlane.f32.xlu0 %v183
      %v185 = vpop.xlane.xlu0 %184
      %v186 = vsel %vm179, %v173, 0.0
      %187 = vadd.xlane.f32.xlu0 %v186
      %v188 = vpop.xlane.xlu0 %187
      %v189 = vsel %vm179, %v174, 0.0
      %190 = vadd.xlane.f32.xlu0 %v189
      %v191 = vpop.xlane.xlu0 %190
      %v192 = vsel %vm179, %v175, 0.0
      %193 = vadd.xlane.f32.xlu0 %v192
      %v194 = vpop.xlane.xlu0 %193
      %v195 = vsel %vm179, %v176, 0.0
      %196 = vadd.xlane.f32.xlu0 %v195
      %v197 = vpop.xlane.xlu0 %196
      %v198 = vsel %vm179, %v177, 0.0
      %199 = vadd.xlane.f32.xlu0 %v198
      %v200 = vpop.xlane.xlu0 %199
      %v201 = vsel %vm179, %v178, 0.0
      %202 = vadd.xlane.f32.xlu0 %v201
      %v203 = vpop.xlane.xlu0 %202
      %v204 = vadd.f32 %v182, 0.0
      %v205 = vadd.f32 %v185, 0.0
      %v206 = vadd.f32 %v188, 0.0
      %v207 = vadd.f32 %v191, 0.0
      %v208 = vadd.f32 %v194, 0.0
      %v209 = vadd.f32 %v197, 0.0
      %v210 = vadd.f32 %v200, 0.0
      %v211 = vadd.f32 %v203, 0.0
      %v212 = vmul.f32 %v204, 0.0625
      %v213 = vmul.f32 %v205, 0.0625
      %v214 = vmul.f32 %v206, 0.0625
      %v215 = vmul.f32 %v207, 0.0625
      %v216 = vmul.f32 %v208, 0.0625
      %v217 = vmul.f32 %v209, 0.0625
      %v218 = vmul.f32 %v210, 0.0625
      %v219 = vmul.f32 %v211, 0.0625
      %v220 = vld [vmem:[%s1] sm:$0xff]
      %v221 = vld [vmem:[%s1 + $0x8] sm:$0xff]
      %v222 = vld [vmem:[%s1 + $0x10] sm:$0xff]
      %v223 = vld [vmem:[%s1 + $0x18] sm:$0xff]
      %v224 = vld [vmem:[%s1 + $0x20] sm:$0xff]
      %v225 = vld [vmem:[%s1 + $0x28] sm:$0xff]
      %v226 = vld [vmem:[%s1 + $0x30] sm:$0xff]
      %v227 = vld [vmem:[%s1 + $0x38] sm:$0xff]
      %v228 = vld [vmem:[%s2] sm:$0xf]
      %v237 = vlaneseq
      %v238 = vand.u32 %v237, 127
      %v239 = vlaneseq
      %v240 = vshrl.u32 %v239, 7
      %v241 = vsub.s32 %v238, %v240
      %v242 = vrot.slane %v212, %v241
      %v243 = vadd.s32 %v238, 4294967288
      %v244 = vlaneseq
      %v245 = vshrl.u32 %v244, 7
      %v246 = vsub.s32 %v243, %v245
      %v247 = vrot.slane %v213, %v246
      %vm248 = vcmask 130112
      %v249 = vsel %vm248, %v247, %v242
      %v250 = vadd.s32 %v238, 4294967280
      %v251 = vlaneseq
      %v252 = vshrl.u32 %v251, 7
      %v253 = vsub.s32 %v250, %v252
      %v254 = vrot.slane %v214, %v253
      %vm255 = vcmask 195712
      %v256 = vsel %vm255, %v254, %v249
      %v257 = vadd.s32 %v238, 4294967272
      %v258 = vlaneseq
      %v259 = vshrl.u32 %v258, 7
      %v260 = vsub.s32 %v257, %v259
      %v261 = vrot.slane %v215, %v260
      %vm262 = vcmask 261312
      %v263 = vsel %vm262, %v261, %v256
      %v264 = vadd.s32 %v238, 4294967264
      %v265 = vlaneseq
      %v266 = vshrl.u32 %v265, 7
      %v267 = vsub.s32 %v264, %v266
      %v268 = vrot.slane %v216, %v267
      %vm269 = vcmask 326912
      %v270 = vsel %vm269, %v268, %v263
      %v271 = vadd.s32 %v238, 4294967256
      %v272 = vlaneseq
      %v273 = vshrl.u32 %v272, 7
      %v274 = vsub.s32 %v271, %v273
      %v275 = vrot.slane %v217, %v274
      %vm276 = vcmask 392512
      %v277 = vsel %vm276, %v275, %v270
      %v278 = vadd.s32 %v238, 4294967248
      %v279 = vlaneseq
      %v280 = vshrl.u32 %v279, 7
      %v281 = vsub.s32 %v278, %v280
      %v282 = vrot.slane %v218, %v281
      %vm283 = vcmask 458112
      %v284 = vsel %vm283, %v282, %v277
      %v285 = vadd.s32 %v238, 4294967240
      %v286 = vlaneseq
      %v287 = vshrl.u32 %v286, 7
      %v288 = vsub.s32 %v285, %v287
      %v289 = vrot.slane %v219, %v288
      %vm290 = vcmask 523712
      %v291 = vsel %vm290, %v289, %v284
      %vm292 = vcmask 523264
      %v293 = vsel %vm292, %v291, 0
      %295 = vmatprep.subr.mxu0 0.0
      %296 = vmatpush1.msra.mxu0 0.0
      %297 = vmatprep.subr.mxu0 0.0
      %298 = vmatpush1.msra.mxu0 0.0
      %299 = vmatprep.subr.mxu0 0.0
      %300 = vmatpush1.msra.mxu0 0.0
      %301 = vmatprep.subr.mxu0 0.0
      %302 = vmatpush1.msra.mxu0 0.0
      %303 = vmatprep.subr.mxu0 0.0
      %304 = vmatpush1.msra.mxu0 0.0
      %305 = vmatprep.subr.mxu0 0.0
      %306 = vmatpush1.msra.mxu0 0.0
      %307 = vmatprep.subr.mxu0 0.0
      %308 = vmatpush1.msra.mxu0 0.0
      %309 = vmatprep.subr.mxu0 0.0
      %310 = vmatpush1.msra.mxu0 0.0
      %311 = vmatprep.subr.mxu0 0.0
      %312 = vmatpush1.msra.mxu0 %v227
      %313 = vmatprep.subr.mxu0 0.0
      %314 = vmatpush1.msra.mxu0 %v226
      %315 = vmatprep.subr.mxu0 0.0
      %316 = vmatpush1.msra.mxu0 %v225
      %317 = vmatprep.subr.mxu0 0.0
      %318 = vmatpush1.msra.mxu0 %v224
      %319 = vmatprep.subr.mxu0 0.0
      %320 = vmatpush1.msra.mxu0 %v223
      %321 = vmatprep.subr.mxu0 0.0
      %322 = vmatpush1.msra.mxu0 %v222
      %323 = vmatprep.subr.mxu0 0.0
      %324 = vmatpush1.msra.mxu0 %v221
      %325 = vmatprep.subr.mxu0 0.0
      %326 = vmatpush1.msra.mxu0 %v220
      %327 = vmatprep.subr.mxu0 0.0
      %328 = vmatpush2.msra.mxu0 0.0
      %329 = vmatprep.subr.mxu0 0.0
      %330 = vmatpush2.msra.mxu0 0.0
      %331 = vmatprep.subr.mxu0 0.0
      %332 = vmatpush2.msra.mxu0 0.0
      %333 = vmatprep.subr.mxu0 0.0
      %334 = vmatpush2.msra.mxu0 0.0
      %335 = vmatprep.subr.mxu0 0.0
      %336 = vmatpush2.msra.mxu0 0.0
      %337 = vmatprep.subr.mxu0 0.0
      %338 = vmatpush2.msra.mxu0 0.0
      %339 = vmatprep.subr.mxu0 0.0
      %340 = vmatpush2.msra.mxu0 0.0
      %341 = vmatprep.subr.mxu0 0.0
      %342 = vmatpush2.msra.mxu0 0.0
      %343 = vmatprep.subr.mxu0 0.0
      %344 = vmatpush2.msra.mxu0 0.0
      %345 = vmatprep.subr.mxu0 0.0
      %346 = vmatpush2.msra.mxu0 0.0
      %347 = vmatprep.subr.mxu0 0.0
      %348 = vmatpush2.msra.mxu0 0.0
      %349 = vmatprep.subr.mxu0 0.0
      %350 = vmatpush2.msra.mxu0 0.0
      %351 = vmatprep.subr.mxu0 0.0
      %352 = vmatpush2.msra.mxu0 0.0
      %353 = vmatprep.subr.mxu0 0.0
      %354 = vmatpush2.msra.mxu0 0.0
      %355 = vmatprep.subr.mxu0 0.0
      %356 = vmatpush2.msra.mxu0 0.0
      %357 = vmatprep.subr.mxu0 0.0
      %358 = vmatpush2.msra.mxu0 0.0
      %359 = vmatprep.mubr.f32.mxu0 0.0
      %360 = vmatmul.mubr.f32.gmra.mxu0 %v293
      %v361 = vpop.f32.mrf.mxu0
      %v362 = vadd.f32 0.0, %v361
      %v363 = vpop.f32.mrf.mxu0
      %364 = vdwg.mxu0
      %v365 = vmax.f32 %v362, 0.0
      %vm366 = vcmask 31744
      %v368 = vsel %vm366, %v365, 0
      %vm370 = vcmask 1043456
      %v372 = vsel %vm370, %v228, 0
      %374 = vmatprep.subr.mxu0 0.0
      %375 = vmatpush1.msra.mxu0 0.0
      %376 = vmatprep.subr.mxu0 0.0
      %377 = vmatpush1.msra.mxu0 0.0
      %378 = vmatprep.subr.mxu0 0.0
      %379 = vmatpush1.msra.mxu0 0.0
      %380 = vmatprep.subr.mxu0 0.0
      %381 = vmatpush1.msra.mxu0 0.0
      %382 = vmatprep.subr.mxu0 0.0
      %383 = vmatpush1.msra.mxu0 0.0
      %384 = vmatprep.subr.mxu0 0.0
      %385 = vmatpush1.msra.mxu0 0.0
      %386 = vmatprep.subr.mxu0 0.0
      %387 = vmatpush1.msra.mxu0 0.0
      %388 = vmatprep.subr.mxu0 0.0
      %389 = vmatpush1.msra.mxu0 0.0
      %390 = vmatprep.subr.mxu0 0.0
      %391 = vmatpush1.msra.mxu0 0.0
      %392 = vmatprep.subr.mxu0 0.0
      %393 = vmatpush1.msra.mxu0 0.0
      %394 = vmatprep.subr.mxu0 0.0
      %395 = vmatpush1.msra.mxu0 0.0
      %396 = vmatprep.subr.mxu0 0.0
      %397 = vmatpush1.msra.mxu0 0.0
      %398 = vmatprep.subr.mxu0 0.0
      %399 = vmatpush1.msra.mxu0 0.0
      %400 = vmatprep.subr.mxu0 0.0
      %401 = vmatpush1.msra.mxu0 0.0
      %402 = vmatprep.subr.mxu0 0.0
      %403 = vmatpush1.msra.mxu0 0.0
      %404 = vmatprep.subr.mxu0 0.0
      %405 = vmatpush1.msra.mxu0 %v372
      %406 = vmatprep.subr.mxu0 0.0
      %407 = vmatpush2.msra.mxu0 0.0
      %408 = vmatprep.subr.mxu0 0.0
      %409 = vmatpush2.msra.mxu0 0.0
      %410 = vmatprep.subr.mxu0 0.0
      %411 = vmatpush2.msra.mxu0 0.0
      %412 = vmatprep.subr.mxu0 0.0
      %413 = vmatpush2.msra.mxu0 0.0
      %414 = vmatprep.subr.mxu0 0.0
      %415 = vmatpush2.msra.mxu0 0.0
      %416 = vmatprep.subr.mxu0 0.0
      %417 = vmatpush2.msra.mxu0 0.0
      %418 = vmatprep.subr.mxu0 0.0
      %419 = vmatpush2.msra.mxu0 0.0
      %420 = vmatprep.subr.mxu0 0.0
      %421 = vmatpush2.msra.mxu0 0.0
      %422 = vmatprep.subr.mxu0 0.0
      %423 = vmatpush2.msra.mxu0 0.0
      %424 = vmatprep.subr.mxu0 0.0
      %425 = vmatpush2.msra.mxu0 0.0
      %426 = vmatprep.subr.mxu0 0.0
      %427 = vmatpush2.msra.mxu0 0.0
      %428 = vmatprep.subr.mxu0 0.0
      %429 = vmatpush2.msra.mxu0 0.0
      %430 = vmatprep.subr.mxu0 0.0
      %431 = vmatpush2.msra.mxu0 0.0
      %432 = vmatprep.subr.mxu0 0.0
      %433 = vmatpush2.msra.mxu0 0.0
      %434 = vmatprep.subr.mxu0 0.0
      %435 = vmatpush2.msra.mxu0 0.0
      %436 = vmatprep.subr.mxu0 0.0
      %437 = vmatpush2.msra.mxu0 0.0
      %438 = vmatprep.mubr.f32.mxu0 0.0
      %439 = vmatmul.mubr.f32.gmra.mxu0 %v368
      %v440 = vpop.f32.mrf.mxu0
      %v441 = vadd.f32 0.0, %v440
      %v442 = vpop.f32.mrf.mxu0
      %443 = vdwg.mxu0
      %v444 = vsub.f32 0.0, %v441
      %v445 = vmul.f32 %v444, 1.442695
      %v446 = vpow.pop %v445
      %v447 = vadd.f32 %v446, 1.0
      %v448 = vrcp.pop %v447
      %v449 = vlaneseq
      %v450 = vshrl.u32 %v449, 7
      %v451 = vsub.s32 0, %v450
      %v452 = vrot.slane %v448, %v451
      %454 = vbcast.lane.b32.xlu0 %v452, 256
      %v455 = vpop.permute.xlu0 %454
      %s457 = sor.u32 256, 8
      %458 = vbcast.lane.b32.xlu0 %v452, %s457
      %v459 = vpop.permute.xlu0 %458
      %s461 = sor.u32 256, 16
      %462 = vbcast.lane.b32.xlu0 %v452, %s461
      %v463 = vpop.permute.xlu0 %462
      %s465 = sor.u32 256, 24
      %466 = vbcast.lane.b32.xlu0 %v452, %s465
      %v467 = vpop.permute.xlu0 %466
      %s469 = sor.u32 256, 32
      %470 = vbcast.lane.b32.xlu0 %v452, %s469
      %v471 = vpop.permute.xlu0 %470
      %s473 = sor.u32 256, 40
      %474 = vbcast.lane.b32.xlu0 %v452, %s473
      %v475 = vpop.permute.xlu0 %474
      %s477 = sor.u32 256, 48
      %478 = vbcast.lane.b32.xlu0 %v452, %s477
      %v479 = vpop.permute.xlu0 %478
      %s481 = sor.u32 256, 56
      %482 = vbcast.lane.b32.xlu0 %v452, %s481
      %v483 = vpop.permute.xlu0 %482
      %v484 = vmul.f32 %v171, %v455
      %v485 = vmul.f32 %v172, %v459
      %v486 = vmul.f32 %v173, %v463
      %v487 = vmul.f32 %v174, %v467
      %v488 = vmul.f32 %v175, %v471
      %v489 = vmul.f32 %v176, %v475
      %v490 = vmul.f32 %v177, %v479
      %v491 = vmul.f32 %v178, %v483
      %492 = vst.msk [vmem:[%s170] sm:$0xff] %vm179, %v484
      %493 = vst.msk [vmem:[%s170 + $0x8] sm:$0xff] %vm179, %v485
      %494 = vst.msk [vmem:[%s170 + $0x10] sm:$0xff] %vm179, %v486
      %495 = vst.msk [vmem:[%s170 + $0x18] sm:$0xff] %vm179, %v487
      %496 = vst.msk [vmem:[%s170 + $0x20] sm:$0xff] %vm179, %v488
      %497 = vst.msk [vmem:[%s170 + $0x28] sm:$0xff] %vm179, %v489
      %498 = vst.msk [vmem:[%s170 + $0x30] sm:$0xff] %vm179, %v490
      %499 = vst.msk [vmem:[%s170 + $0x38] sm:$0xff] %vm179, %v491
      %p500 = scmp.lt.s32.totalorder %s14, 1
      %s501 = scalar_select %p500, %s14, 1
      %s502 = smul.addr %s501, 8
      %s503 = smul.addr %s502, 8
      %s504 = scalar_lea.vmem %s3, %s503
      // Predicated region
      $region33: #{tpu_custom_call.1} parent=31 // pred_check
        %p505 = pneg %p100
      $region34: #{tpu_custom_call.1} parent=31 // pred_check_branch
        %507 = sbr.rel (%p505) target = $region36
      $region35: #{tpu_custom_call.1} parent=31 // pred_region
        _
      $region36: #{tpu_custom_call.1} parent=31 // pred_fallthru
        _
    $region32: #{tpu_custom_call.1} parent=5 // pred_fallthru
      _
    %p508 = scmp.le.s32.totalorder 2, %s9
    // Predicated region
    $region37: #{tpu_custom_call.1} parent=5 // pred_check
      %p509 = pneg %p508
    $region38: #{tpu_custom_call.1} parent=5 // pred_check_branch
      %511 = sbr.rel (%p509) target = $region40
    $region39: #{tpu_custom_call.1} parent=5 // pred_region
      %s512 = ssub.s32 %s9, 2
      // Predicated region
      $region41: #{tpu_custom_call.1} parent=39 // pred_check
        %p513 = pneg %p106
      $region42: #{tpu_custom_call.1} parent=39 // pred_check_branch
        %515 = sbr.rel (%p513) target = $region44
      $region43: #{tpu_custom_call.1} parent=39 // pred_region
        %p516 = scmp.lt.s32.totalorder %s15, 1
        %s517 = scalar_select %p516, %s15, 1
        %s518 = smul.addr %s517, 8
        %s519 = smul.addr %s518, 8
        %s520 = scalar_lea.vmem %s3, %s519
      $region44: #{tpu_custom_call.1} parent=39 // pred_fallthru
        _
    $region40: #{tpu_custom_call.1} parent=5 // pred_fallthru
      _
  $region6: #{tpu_custom_call.1} parent=0 // loop_footer
    %s13 = sadd.s32 1, %s9
  $region7: #{tpu_custom_call.1} parent=0 // loop_footer_branch
    %8 = sbr.rel target = $region3
  $region8: #{tpu_custom_call.1} parent=0 // loop_exit
    _

</llo_original>
